<compile_context>
chip_gen: v7x
topology: tpu7x:2x2x1
jax: 0.10.0
libtpu: 0.0.40
codegen_flags: <defaults>
</compile_context>

<pallas_src>
import functools

import jax
import jax.numpy as jnp
from jax.experimental import pallas as pl
from jax.experimental.pallas import tpu as pltpu


_NEG_INF = -1e30


def _layer_norm(v, gamma, beta, eps=1e-5):
    mu = jnp.mean(v, axis=-1, keepdims=True)
    var = jnp.mean((v - mu) ** 2, axis=-1, keepdims=True)
    return (v - mu) * jax.lax.rsqrt(var + eps) * gamma + beta


# ---------------------------------------------------------------------------
# Kernel 1: LayerNorm1 + fused QKV projection (head-major Q/V, transposed K).
# ---------------------------------------------------------------------------
def _ln_qkv_kernel(x_ref, g1_ref, b1_ref, wqkv_ref, q_ref, kT_ref, v_ref,
                   *, num_heads, head_size):
    D = x_ref.shape[2]
    ln1 = _layer_norm(x_ref[0], g1_ref[0], b1_ref[0]).astype(jnp.bfloat16)
    qkv = jnp.dot(ln1, wqkv_ref[...],
                  preferred_element_type=jnp.float32)        # (TQ, 3D) f32
    q_bf = qkv[:, :D].astype(jnp.bfloat16)
    k_t = qkv[:, D:2 * D].T.astype(jnp.bfloat16)              # (D, TQ): one
    v_bf = qkv[:, 2 * D:].astype(jnp.bfloat16)                 # transpose here,
    for h in range(num_heads):                                 # none in attn loop
        lo, hi = h * head_size, (h + 1) * head_size
        q_ref[0, h] = q_bf[:, lo:hi]
        kT_ref[0, h] = k_t[lo:hi, :]                           # lane-dense rows
        v_ref[0, h] = v_bf[:, lo:hi]


# ---------------------------------------------------------------------------
# Kernel 2: KV-tiled flash attention + output projection + residual 1.
# ---------------------------------------------------------------------------
def _attn_kernel(x_ref, q_ref, kT_ref, v_ref, wp_ref, bp_ref,
                 o_ref, m_sc, l_sc, acc_sc, gather_sc, *, scale, tq, tk):
    H, hs = q_ref.shape[1], q_ref.shape[3]
    qi = pl.program_id(1)
    kv = pl.program_id(2)

    @pl.when(kv == 0)
    def _init():
        m_sc[...] = jnp.full_like(m_sc, _NEG_INF)
        l_sc[...] = jnp.zeros_like(l_sc)
        acc_sc[...] = jnp.zeros_like(acc_sc)

    # Causal block skip: this KV tile contributes only if it starts at or
    # before the last query row of this query tile.  (Its DMA was also
    # skipped by the clamped index_map in the wrapper.)
    @pl.when(kv * tk < (qi + 1) * tq)
    def _compute():
        q = q_ref[0]                                    # (H, TQ, hs)  bf16
        kT = kT_ref[0]                                  # (H, hs, TK)  bf16
        v = v_ref[0]                                    # (H, TK, hs)  bf16
        s = jnp.einsum("hqd,hdk->hqk", q, kT,
                       preferred_element_type=jnp.float32) * scale
        row = qi * tq + jax.lax.broadcasted_iota(jnp.int32, (1, tq, tk), 1)
        col = kv * tk + jax.lax.broadcasted_iota(jnp.int32, (1, tq, tk), 2)
        s = jnp.where(col <= row, s, _NEG_INF)
        m_prev = m_sc[...]
        m_new = jnp.maximum(m_prev, jnp.max(s, axis=-1, keepdims=True))
        alpha = jnp.exp(m_prev - m_new)
        p = jnp.exp(s - m_new)
        l_sc[...] = alpha * l_sc[...] + jnp.sum(p, axis=-1, keepdims=True)
        acc_sc[...] = alpha * acc_sc[...] + jnp.einsum(
            "hqk,hkd->hqd", p.astype(jnp.bfloat16), v,
            preferred_element_type=jnp.float32)
        m_sc[...] = m_new

    @pl.when(kv == pl.num_programs(2) - 1)
    def _finalize():
        # approx reciprocal (EUP slot): ~2^-12 rel err, well inside bf16 noise.
        out_heads = acc_sc[...] * pl.reciprocal(l_sc[...], approx=True)
        for h in range(H):                               # static, small
            gather_sc[:, h * hs:(h + 1) * hs] = out_heads[h]
        attn = gather_sc[...].astype(jnp.bfloat16)
        proj = jnp.dot(attn, wp_ref[...],
                       preferred_element_type=jnp.float32) + bp_ref[0]
        o_ref[0] = (x_ref[0] + proj).astype(o_ref.dtype)


# ---------------------------------------------------------------------------
# Kernel 3: LayerNorm2 + FFN (hidden dim streamed via grid axis) + residual 2.
# ---------------------------------------------------------------------------
def _ffn_kernel(x1_ref, g2_ref, b2_ref, w1_ref, bf1_ref, w2_ref, bf2_ref,
                o_ref, ln2_sc, acc_sc):
    h = pl.program_id(2)

    @pl.when(h == 0)
    def _init():
        ln2_sc[...] = _layer_norm(x1_ref[0], g2_ref[0],
                                  b2_ref[0]).astype(ln2_sc.dtype)
        acc_sc[...] = jnp.zeros_like(acc_sc)

    hidden = jnp.dot(ln2_sc[...], w1_ref[...],
                     preferred_element_type=jnp.float32) + bf1_ref[0]
    hidden = jnp.maximum(hidden, 0.0).astype(jnp.bfloat16)
    acc_sc[...] += jnp.dot(hidden, w2_ref[...],
                           preferred_element_type=jnp.float32)

    @pl.when(h == pl.num_programs(2) - 1)
    def _finalize():
        o_ref[0] = (x1_ref[0] + acc_sc[...] + bf2_ref[0]).astype(o_ref.dtype)


# ---------------------------------------------------------------------------
# Wrapper
# ---------------------------------------------------------------------------
def _round_up(x, m):
    return ((x + m - 1) // m) * m


def _seq_tiles(T):
    """(TQ, TK, T_pad): 8/128-aligned tiles; TK decoupled from TQ."""
    if T <= 128:
        tq = _round_up(T, 8)
        return tq, tq, tq
    t_pad = _round_up(T, 128)
    tq = 128
    tk = 256 if t_pad % 256 == 0 else 128
    return tq, tk, t_pad


def _ffn_chunk(dh):
    for c in (512, 256, 128):
        if dh % c == 0:
            return c
    return dh                           # non-multiple-of-128 hidden: no chunking


def _vmem_limit(request_bytes):
    # Generation-aware scoped-VMEM cap: leave headroom for Mosaic internal
    # scratch (v7x: 64 MiB physical; v5e/v6e: 128 MiB).
    try:
        physical = pltpu.get_tpu_info().vmem_capacity_bytes
    except Exception:   # perf hint only -- fall back to the smallest generation
        physical = 64 * 2 ** 20
    ceiling = (physical * 3) // 4
    return int(min(max(request_bytes, 32 * 2 ** 20), ceiling))


def transformer_block(x, params, *, num_heads):
    B, T, D = x.shape
    hs = D // num_heads
    assert num_heads * hs == D, "dim_embed must be divisible by num_heads"
    H = num_heads

    TQ, TK, T_pad = _seq_tiles(T)
    num_q, num_kv = T_pad // TQ, T_pad // TK
    CH = _ffn_chunk(4 * D)
    num_h = (4 * D) // CH

    bf16 = jnp.bfloat16
    wqkv = jnp.concatenate([params["wq"], params["wk"], params["wv"]],
                           axis=1).astype(bf16)
    wp, w1, w2 = (params[k].astype(bf16) for k in ("wp", "w1", "w2"))
    g1, b1, g2, b2 = params["g1"], params["b1"], params["g2"], params["b2"]
    bp, bf1, bf2 = params["bp"], params["bf1"], params["bf2"]

    x_p = x if T_pad == T else jnp.pad(x, ((0, 0), (0, T_pad - T), (0, 0)))

    # ---- Kernel 1: LayerNorm1 + fused QKV projection ----------------------
    vmem1 = _vmem_limit(48 * TQ * D + 14 * D * D)
    q, kT, v = pl.pallas_call(
        functools.partial(_ln_qkv_kernel, num_heads=H, head_size=hs),
        out_shape=(
            jax.ShapeDtypeStruct((B, H, T_pad, hs), bf16),
            jax.ShapeDtypeStruct((B, H, hs, T_pad), bf16),
            jax.ShapeDtypeStruct((B, H, T_pad, hs), bf16),
        ),
        grid_spec=pltpu.PrefetchScalarGridSpec(
            num_scalar_prefetch=0,
            grid=(B, num_q),
            in_specs=[
                pl.BlockSpec((1, TQ, D), lambda b, i: (b, i, 0)),      # x tile
                pl.BlockSpec((1, D), lambda b, i: (0, 0)),             # g1
                pl.BlockSpec((1, D), lambda b, i: (0, 0)),             # b1
                pl.BlockSpec((D, 3 * D), lambda b, i: (0, 0)),         # Wqkv
            ],
            out_specs=(
                pl.BlockSpec((1, H, TQ, hs), lambda b, i: (b, 0, i, 0)),
                pl.BlockSpec((1, H, hs, TQ), lambda b, i: (b, 0, 0, i)),
                pl.BlockSpec((1, H, TQ, hs), lambda b, i: (b, 0, i, 0)),
            ),
        ),
        compiler_params=pltpu.CompilerParams(
            dimension_semantics=("parallel", "parallel"),
            vmem_limit_bytes=vmem1,
        ),
    )(x_p, g1, b1, wqkv)

    # ---- Kernel 2: flash attention + output projection + residual 1 -------
    def _last_kv(i):
        # Last KV block this query tile can (causally) see.
        return ((i + 1) * TQ - 1) // TK

    def kT_index(b, i, j):
        return (b, 0, 0, jnp.minimum(j, _last_kv(i)))      # clamp => DMA skipped

    def v_index(b, i, j):
        return (b, 0, jnp.minimum(j, _last_kv(i)), 0)

    vmem2 = _vmem_limit(24 * TQ * D + 8 * TK * D + 4 * D * D
                        + 16 * H * TQ * TK + (1 << 21))
    x1 = pl.pallas_call(
        functools.partial(
            _attn_kernel,
            # NOTE: reference scales by dim_embed**-0.5 (not head_size**-0.5)
            # -- intentional, matches the PyTorch module.
            scale=float(D) ** -0.5, tq=TQ, tk=TK),
        out_shape=jax.ShapeDtypeStruct((B, T_pad, D), jnp.float32),
        grid_spec=pltpu.PrefetchScalarGridSpec(
            num_scalar_prefetch=0,
            grid=(B, num_q, num_kv),
            in_specs=[
                pl.BlockSpec((1, TQ, D), lambda b, i, j: (b, i, 0)),        # x
                pl.BlockSpec((1, H, TQ, hs), lambda b, i, j: (b, 0, i, 0)),  # q
                pl.BlockSpec((1, H, hs, TK), kT_index),                      # k^T
                pl.BlockSpec((1, H, TK, hs), v_index),                       # v
                pl.BlockSpec((D, D), lambda b, i, j: (0, 0)),                # Wp
                pl.BlockSpec((1, D), lambda b, i, j: (0, 0)),                # bp
            ],
            out_specs=pl.BlockSpec((1, TQ, D), lambda b, i, j: (b, i, 0)),
            scratch_shapes=[
                pltpu.VMEM((H, TQ, 1), jnp.float32),      # running max
                pltpu.VMEM((H, TQ, 1), jnp.float32),      # running sum
                pltpu.VMEM((H, TQ, hs), jnp.float32),     # PV accumulator
                pltpu.VMEM((TQ, D), jnp.float32),         # head gather
            ],
        ),
        compiler_params=pltpu.CompilerParams(
            dimension_semantics=("parallel", "parallel", "arbitrary"),
            vmem_limit_bytes=vmem2,
        ),
    )(x_p, q, kT, v, wp, bp)

    # ---- Kernel 3: LayerNorm2 + streamed FFN + residual 2 ------------------
    vmem3 = _vmem_limit(30 * TQ * D + 8 * D * CH + 8 * TQ * CH + (1 << 21))
    out = pl.pallas_call(
        _ffn_kernel,
        out_shape=jax.ShapeDtypeStruct((B, T_pad, D), x.dtype),
        grid_spec=pltpu.PrefetchScalarGridSpec(
            num_scalar_prefetch=0,
            grid=(B, num_q, num_h),
            in_specs=[
                pl.BlockSpec((1, TQ, D), lambda b, i, h: (b, i, 0)),   # x1
                pl.BlockSpec((1, D), lambda b, i, h: (0, 0)),          # g2
                pl.BlockSpec((1, D), lambda b, i, h: (0, 0)),          # b2
                pl.BlockSpec((D, CH), lambda b, i, h: (0, h)),         # W1 chunk
                pl.BlockSpec((1, CH), lambda b, i, h: (0, h)),         # b_ff1 chunk
                pl.BlockSpec((CH, D), lambda b, i, h: (h, 0)),         # W2 chunk
                pl.BlockSpec((1, D), lambda b, i, h: (0, 0)),          # b_ff2
            ],
            out_specs=pl.BlockSpec((1, TQ, D), lambda b, i, h: (b, i, 0)),
            scratch_shapes=[
                pltpu.VMEM((TQ, D), jnp.bfloat16),        # ln2(x1) tile
                pltpu.VMEM((TQ, D), jnp.float32),         # FFN accumulator
            ],
        ),
        compiler_params=pltpu.CompilerParams(
            dimension_semantics=("parallel", "parallel", "arbitrary"),
            vmem_limit_bytes=vmem3,
        ),
    )(x1, g2, b2, w1, bf1, w2, bf2)

    return out if T_pad == T else out[:, :T, :]


# ---------------------------------------------------------------------------
# Pure-JAX reference (mirrors the PyTorch module exactly, in f32).
# ---------------------------------------------------------------------------
def _reference(x, params, *, num_heads):
    B, T, D = x.shape
    hs = D // num_heads

    ln1 = _layer_norm(x, params["g1"][0], params["b1"][0])
    q = ln1 @ params["wq"]
    k = ln1 @ params["wk"]
    v = ln1 @ params["wv"]
    mask = jnp.tril(jnp.ones((T, T), bool))
    outs = []
    for h in range(num_heads):
        qh, kh, vh = (a[..., h * hs:(h + 1) * hs] for a in (q, k, v))
        w = jnp.einsum("btd,bsd->bts", qh, kh) * (D ** -0.5)
        w = jnp.where(mask, w, -jnp.inf)
        w = jax.nn.softmax(w, axis=-1)
        outs.append(jnp.einsum("bts,bsd->btd", w, vh))
    attn = jnp.concatenate(outs, axis=-1) @ params["wp"] + params["bp"][0]
    x1 = x + attn
    ln2 = _layer_norm(x1, params["g2"][0], params["b2"][0])
    ff = jnp.maximum(ln2 @ params["w1"] + params["bf1"][0], 0.0) @ params["w2"] \
        + params["bf2"][0]
    return x1 + ff


def init_params(key, dim_embed):
    D = dim_embed
    ks = jax.random.split(key, 8)
    scale = 0.02
    return {
        "g1": jnp.ones((1, D), jnp.float32),
        "b1": jnp.zeros((1, D), jnp.float32),
        "wq": scale * jax.random.normal(ks[0], (D, D), jnp.float32),
        "wk": scale * jax.random.normal(ks[1], (D, D), jnp.float32),
        "wv": scale * jax.random.normal(ks[2], (D, D), jnp.float32),
        "wp": scale * jax.random.normal(ks[3], (D, D), jnp.float32),
        "bp": scale * jax.random.normal(ks[4], (1, D), jnp.float32),
        "g2": jnp.ones((1, D), jnp.float32),
        "b2": jnp.zeros((1, D), jnp.float32),
        "w1": scale * jax.random.normal(ks[5], (D, 4 * D), jnp.float32),
        "bf1": jnp.zeros((1, 4 * D), jnp.float32),
        "w2": scale * jax.random.normal(ks[6], (4 * D, D), jnp.float32),
        "bf2": jnp.zeros((1, D), jnp.float32),
    }


if __name__ == "__main__":
    B, T, D = 2, 8, 32      # batch, seq (== max_length), dim_embed
    num_heads = 4

    key = jax.random.PRNGKey(0)
    kx, kp = jax.random.split(key)
    x = jax.random.normal(kx, (B, T, D), jnp.float32)
    params = init_params(kp, D)

    out = transformer_block(x, params, num_heads=num_heads)
    out = jax.block_until_ready(out)

    ref = _reference(x, params, num_heads=num_heads)
    assert out.shape == (B, T, D)
    # bf16 matmul operands inside the kernels vs f32 reference -> relaxed tol.
    assert jnp.allclose(out, ref, atol=2e-2, rtol=2e-2), (
        f"mismatch vs reference: max abs err {jnp.max(jnp.abs(out - ref))}")

    print("KERNEL_OK")
</pallas_src>

<mosaic_0001>
module attributes {stable_mosaic.version = 11 : i64} {
  func.func @_ln_qkv_kernel(%arg0: i32, %arg1: i32, %arg2: memref<1x8x32xf32, #tpu.memory_space<vmem>>, %arg3: memref<1x32xf32, #tpu.memory_space<vmem>>, %arg4: memref<1x32xf32, #tpu.memory_space<vmem>>, %arg5: memref<32x96xbf16, #tpu.memory_space<vmem>>, %arg6: memref<1x4x8x8xbf16, #tpu.memory_space<vmem>>, %arg7: memref<1x4x8x8xbf16, #tpu.memory_space<vmem>>, %arg8: memref<1x4x8x8xbf16, #tpu.memory_space<vmem>>) attributes {dimension_semantics = [#tpu.dimension_semantics<parallel>, #tpu.dimension_semantics<parallel>], iteration_bounds = array<i64: 2, 1>, scalar_prefetch = 0 : i64, scratch_operands = 0 : i64, tpu.core_type = #tpu.core_type<tc>, window_params = [{transform_indices = @transform_0, window_bounds = array<i64: 1, 8, 32>}, {pipeline_mode = #tpu.pipeline_mode<synchronous>, transform_indices = @transform_1, window_bounds = array<i64: 1, 32>}, {pipeline_mode = #tpu.pipeline_mode<synchronous>, transform_indices = @transform_2, window_bounds = array<i64: 1, 32>}, {pipeline_mode = #tpu.pipeline_mode<synchronous>, transform_indices = @transform_3, window_bounds = array<i64: 32, 96>}, {transform_indices = @transform_4, window_bounds = array<i64: 1, 4, 8, 8>}, {transform_indices = @transform_5, window_bounds = array<i64: 1, 4, 8, 8>}, {transform_indices = @transform_6, window_bounds = array<i64: 1, 4, 8, 8>}]} {
    %c0 = arith.constant 0 : index
    %c0_0 = arith.constant 0 : index
    %c0_1 = arith.constant 0 : index
    %0 = vector.load %arg2[%c0, %c0_0, %c0_1] : memref<1x8x32xf32, #tpu.memory_space<vmem>>, vector<1x8x32xf32>
    %1 = vector.shape_cast %0 : vector<1x8x32xf32> to vector<8x32xf32>
    %c0_2 = arith.constant 0 : index
    %c0_3 = arith.constant 0 : index
    %2 = vector.load %arg3[%c0_2, %c0_3] : memref<1x32xf32, #tpu.memory_space<vmem>>, vector<1x32xf32>
    %3 = vector.shape_cast %2 : vector<1x32xf32> to vector<32xf32>
    %c0_4 = arith.constant 0 : index
    %c0_5 = arith.constant 0 : index
    %4 = vector.load %arg4[%c0_4, %c0_5] : memref<1x32xf32, #tpu.memory_space<vmem>>, vector<1x32xf32>
    %5 = vector.shape_cast %4 : vector<1x32xf32> to vector<32xf32>
    %cst = arith.constant dense<0.000000e+00> : vector<8xf32>
    %6 = vector.multi_reduction <add>, %1, %cst [1] : vector<8x32xf32> to vector<8xf32>
    %7 = vector.shape_cast %6 : vector<8xf32> to vector<8x1xf32>
    %cst_6 = arith.constant 3.200000e+01 : f32
    %8 = vector.broadcast %cst_6 : f32 to vector<8x1xf32>
    %9 = arith.divf %7, %8 : vector<8x1xf32>
    %10 = vector.broadcast %9 : vector<8x1xf32> to vector<8x32xf32>
    %11 = arith.subf %1, %10 : vector<8x32xf32>
    %12 = arith.mulf %11, %11 : vector<8x32xf32>
    %cst_7 = arith.constant dense<0.000000e+00> : vector<8xf32>
    %13 = vector.multi_reduction <add>, %12, %cst_7 [1] : vector<8x32xf32> to vector<8xf32>
    %14 = vector.shape_cast %13 : vector<8xf32> to vector<8x1xf32>
    %cst_8 = arith.constant 3.200000e+01 : f32
    %15 = vector.broadcast %cst_8 : f32 to vector<8x1xf32>
    %16 = arith.divf %14, %15 : vector<8x1xf32>
    %17 = vector.broadcast %9 : vector<8x1xf32> to vector<8x32xf32>
    %18 = arith.subf %1, %17 : vector<8x32xf32>
    %cst_9 = arith.constant 9.99999974E-6 : f32
    %19 = vector.broadcast %cst_9 : f32 to vector<8x1xf32>
    %20 = arith.addf %16, %19 : vector<8x1xf32>
    %21 = math.rsqrt %20 : vector<8x1xf32>
    %22 = vector.broadcast %21 : vector<8x1xf32> to vector<8x32xf32>
    %23 = arith.mulf %18, %22 : vector<8x32xf32>
    %24 = vector.shape_cast %3 : vector<32xf32> to vector<1x32xf32>
    %25 = vector.broadcast %24 : vector<1x32xf32> to vector<8x32xf32>
    %26 = arith.mulf %23, %25 : vector<8x32xf32>
    %27 = vector.shape_cast %5 : vector<32xf32> to vector<1x32xf32>
    %28 = vector.broadcast %27 : vector<1x32xf32> to vector<8x32xf32>
    %29 = arith.addf %26, %28 : vector<8x32xf32>
    %30 = arith.truncf %29 : vector<8x32xf32> to vector<8x32xbf16>
    %c0_10 = arith.constant 0 : index
    %c0_11 = arith.constant 0 : index
    %31 = vector.load %arg5[%c0_10, %c0_11] : memref<32x96xbf16, #tpu.memory_space<vmem>>, vector<32x96xbf16>
    %cst_12 = arith.constant dense<0.000000e+00> : vector<8x96xf32>
    %32 = tpu.matmul %30, %31, %cst_12 {dimension_numbers = #tpu.dot_dimension_numbers<[1], [0], [0], [1], [0, 0, 1, 1], [], []>} : vector<8x32xbf16>, vector<32x96xbf16>, vector<8x96xf32> -> vector<8x96xf32>
    %33 = vector.extract_strided_slice %32 {offsets = [0, 0], sizes = [8, 32], strides = [1, 1]} : vector<8x96xf32> to vector<8x32xf32>
    %34 = arith.truncf %33 : vector<8x32xf32> to vector<8x32xbf16>
    %35 = vector.extract_strided_slice %32 {offsets = [0, 32], sizes = [8, 32], strides = [1, 1]} : vector<8x96xf32> to vector<8x32xf32>
    %36 = tpu.transpose %35, [1, 0] : vector<8x32xf32> -> vector<32x8xf32>
    %37 = arith.truncf %36 : vector<32x8xf32> to vector<32x8xbf16>
    %38 = vector.extract_strided_slice %32 {offsets = [0, 64], sizes = [8, 32], strides = [1, 1]} : vector<8x96xf32> to vector<8x32xf32>
    %39 = arith.truncf %38 : vector<8x32xf32> to vector<8x32xbf16>
    %40 = vector.extract_strided_slice %34 {offsets = [0, 0], sizes = [8, 8], strides = [1, 1]} : vector<8x32xbf16> to vector<8x8xbf16>
    %c0_13 = arith.constant 0 : index
    %c0_14 = arith.constant 0 : index
    %c0_15 = arith.constant 0 : index
    %c0_16 = arith.constant 0 : index
    %41 = vector.load %arg6[%c0_13, %c0_14, %c0_15, %c0_16] : memref<1x4x8x8xbf16, #tpu.memory_space<vmem>>, vector<1x1x8x8xbf16>
    %42 = vector.shape_cast %41 : vector<1x1x8x8xbf16> to vector<8x8xbf16>
    %43 = vector.shape_cast %40 : vector<8x8xbf16> to vector<1x1x8x8xbf16>
    tpu.vector_store %arg6[%c0_13, %c0_14, %c0_15, %c0_16], %43 {strides = array<i32>} : memref<1x4x8x8xbf16, #tpu.memory_space<vmem>>, vector<1x1x8x8xbf16>,
    %44 = vector.extract_strided_slice %37 {offsets = [0, 0], sizes = [8, 8], strides = [1, 1]} : vector<32x8xbf16> to vector<8x8xbf16>
    %c0_17 = arith.constant 0 : index
    %c0_18 = arith.constant 0 : index
    %c0_19 = arith.constant 0 : index
    %c0_20 = arith.constant 0 : index
    %45 = vector.load %arg7[%c0_17, %c0_18, %c0_19, %c0_20] : memref<1x4x8x8xbf16, #tpu.memory_space<vmem>>, vector<1x1x8x8xbf16>
    %46 = vector.shape_cast %45 : vector<1x1x8x8xbf16> to vector<8x8xbf16>
    %47 = vector.shape_cast %44 : vector<8x8xbf16> to vector<1x1x8x8xbf16>
    tpu.vector_store %arg7[%c0_17, %c0_18, %c0_19, %c0_20], %47 {strides = array<i32>} : memref<1x4x8x8xbf16, #tpu.memory_space<vmem>>, vector<1x1x8x8xbf16>,
    %48 = vector.extract_strided_slice %39 {offsets = [0, 0], sizes = [8, 8], strides = [1, 1]} : vector<8x32xbf16> to vector<8x8xbf16>
    %c0_21 = arith.constant 0 : index
    %c0_22 = arith.constant 0 : index
    %c0_23 = arith.constant 0 : index
    %c0_24 = arith.constant 0 : index
    %49 = vector.load %arg8[%c0_21, %c0_22, %c0_23, %c0_24] : memref<1x4x8x8xbf16, #tpu.memory_space<vmem>>, vector<1x1x8x8xbf16>
    %50 = vector.shape_cast %49 : vector<1x1x8x8xbf16> to vector<8x8xbf16>
    %51 = vector.shape_cast %48 : vector<8x8xbf16> to vector<1x1x8x8xbf16>
    tpu.vector_store %arg8[%c0_21, %c0_22, %c0_23, %c0_24], %51 {strides = array<i32>} : memref<1x4x8x8xbf16, #tpu.memory_space<vmem>>, vector<1x1x8x8xbf16>,
    %52 = vector.extract_strided_slice %34 {offsets = [0, 8], sizes = [8, 8], strides = [1, 1]} : vector<8x32xbf16> to vector<8x8xbf16>
    %c0_25 = arith.constant 0 : index
    %c1 = arith.constant 1 : index
    %c0_26 = arith.constant 0 : index
    %c0_27 = arith.constant 0 : index
    %53 = vector.load %arg6[%c0_25, %c1, %c0_26, %c0_27] : memref<1x4x8x8xbf16, #tpu.memory_space<vmem>>, vector<1x1x8x8xbf16>
    %54 = vector.shape_cast %53 : vector<1x1x8x8xbf16> to vector<8x8xbf16>
    %55 = vector.shape_cast %52 : vector<8x8xbf16> to vector<1x1x8x8xbf16>
    tpu.vector_store %arg6[%c0_25, %c1, %c0_26, %c0_27], %55 {strides = array<i32>} : memref<1x4x8x8xbf16, #tpu.memory_space<vmem>>, vector<1x1x8x8xbf16>,
    %56 = vector.extract_strided_slice %37 {offsets = [8, 0], sizes = [8, 8], strides = [1, 1]} : vector<32x8xbf16> to vector<8x8xbf16>
    %c0_28 = arith.constant 0 : index
    %c1_29 = arith.constant 1 : index
    %c0_30 = arith.constant 0 : index
    %c0_31 = arith.constant 0 : index
    %57 = vector.load %arg7[%c0_28, %c1_29, %c0_30, %c0_31] : memref<1x4x8x8xbf16, #tpu.memory_space<vmem>>, vector<1x1x8x8xbf16>
    %58 = vector.shape_cast %57 : vector<1x1x8x8xbf16> to vector<8x8xbf16>
    %59 = vector.shape_cast %56 : vector<8x8xbf16> to vector<1x1x8x8xbf16>
    tpu.vector_store %arg7[%c0_28, %c1_29, %c0_30, %c0_31], %59 {strides = array<i32>} : memref<1x4x8x8xbf16, #tpu.memory_space<vmem>>, vector<1x1x8x8xbf16>,
    %60 = vector.extract_strided_slice %39 {offsets = [0, 8], sizes = [8, 8], strides = [1, 1]} : vector<8x32xbf16> to vector<8x8xbf16>
    %c0_32 = arith.constant 0 : index
    %c1_33 = arith.constant 1 : index
    %c0_34 = arith.constant 0 : index
    %c0_35 = arith.constant 0 : index
    %61 = vector.load %arg8[%c0_32, %c1_33, %c0_34, %c0_35] : memref<1x4x8x8xbf16, #tpu.memory_space<vmem>>, vector<1x1x8x8xbf16>
    %62 = vector.shape_cast %61 : vector<1x1x8x8xbf16> to vector<8x8xbf16>
    %63 = vector.shape_cast %60 : vector<8x8xbf16> to vector<1x1x8x8xbf16>
    tpu.vector_store %arg8[%c0_32, %c1_33, %c0_34, %c0_35], %63 {strides = array<i32>} : memref<1x4x8x8xbf16, #tpu.memory_space<vmem>>, vector<1x1x8x8xbf16>,
    %64 = vector.extract_strided_slice %34 {offsets = [0, 16], sizes = [8, 8], strides = [1, 1]} : vector<8x32xbf16> to vector<8x8xbf16>
    %c0_36 = arith.constant 0 : index
    %c2 = arith.constant 2 : index
    %c0_37 = arith.constant 0 : index
    %c0_38 = arith.constant 0 : index
    %65 = vector.load %arg6[%c0_36, %c2, %c0_37, %c0_38] : memref<1x4x8x8xbf16, #tpu.memory_space<vmem>>, vector<1x1x8x8xbf16>
    %66 = vector.shape_cast %65 : vector<1x1x8x8xbf16> to vector<8x8xbf16>
    %67 = vector.shape_cast %64 : vector<8x8xbf16> to vector<1x1x8x8xbf16>
    tpu.vector_store %arg6[%c0_36, %c2, %c0_37, %c0_38], %67 {strides = array<i32>} : memref<1x4x8x8xbf16, #tpu.memory_space<vmem>>, vector<1x1x8x8xbf16>,
    %68 = vector.extract_strided_slice %37 {offsets = [16, 0], sizes = [8, 8], strides = [1, 1]} : vector<32x8xbf16> to vector<8x8xbf16>
    %c0_39 = arith.constant 0 : index
    %c2_40 = arith.constant 2 : index
    %c0_41 = arith.constant 0 : index
    %c0_42 = arith.constant 0 : index
    %69 = vector.load %arg7[%c0_39, %c2_40, %c0_41, %c0_42] : memref<1x4x8x8xbf16, #tpu.memory_space<vmem>>, vector<1x1x8x8xbf16>
    %70 = vector.shape_cast %69 : vector<1x1x8x8xbf16> to vector<8x8xbf16>
    %71 = vector.shape_cast %68 : vector<8x8xbf16> to vector<1x1x8x8xbf16>
    tpu.vector_store %arg7[%c0_39, %c2_40, %c0_41, %c0_42], %71 {strides = array<i32>} : memref<1x4x8x8xbf16, #tpu.memory_space<vmem>>, vector<1x1x8x8xbf16>,
    %72 = vector.extract_strided_slice %39 {offsets = [0, 16], sizes = [8, 8], strides = [1, 1]} : vector<8x32xbf16> to vector<8x8xbf16>
    %c0_43 = arith.constant 0 : index
    %c2_44 = arith.constant 2 : index
    %c0_45 = arith.constant 0 : index
    %c0_46 = arith.constant 0 : index
    %73 = vector.load %arg8[%c0_43, %c2_44, %c0_45, %c0_46] : memref<1x4x8x8xbf16, #tpu.memory_space<vmem>>, vector<1x1x8x8xbf16>
    %74 = vector.shape_cast %73 : vector<1x1x8x8xbf16> to vector<8x8xbf16>
    %75 = vector.shape_cast %72 : vector<8x8xbf16> to vector<1x1x8x8xbf16>
    tpu.vector_store %arg8[%c0_43, %c2_44, %c0_45, %c0_46], %75 {strides = array<i32>} : memref<1x4x8x8xbf16, #tpu.memory_space<vmem>>, vector<1x1x8x8xbf16>,
    %76 = vector.extract_strided_slice %34 {offsets = [0, 24], sizes = [8, 8], strides = [1, 1]} : vector<8x32xbf16> to vector<8x8xbf16>
    %c0_47 = arith.constant 0 : index
    %c3 = arith.constant 3 : index
    %c0_48 = arith.constant 0 : index
    %c0_49 = arith.constant 0 : index
    %77 = vector.load %arg6[%c0_47, %c3, %c0_48, %c0_49] : memref<1x4x8x8xbf16, #tpu.memory_space<vmem>>, vector<1x1x8x8xbf16>
    %78 = vector.shape_cast %77 : vector<1x1x8x8xbf16> to vector<8x8xbf16>
    %79 = vector.shape_cast %76 : vector<8x8xbf16> to vector<1x1x8x8xbf16>
    tpu.vector_store %arg6[%c0_47, %c3, %c0_48, %c0_49], %79 {strides = array<i32>} : memref<1x4x8x8xbf16, #tpu.memory_space<vmem>>, vector<1x1x8x8xbf16>,
    %80 = vector.extract_strided_slice %37 {offsets = [24, 0], sizes = [8, 8], strides = [1, 1]} : vector<32x8xbf16> to vector<8x8xbf16>
    %c0_50 = arith.constant 0 : index
    %c3_51 = arith.constant 3 : index
    %c0_52 = arith.constant 0 : index
    %c0_53 = arith.constant 0 : index
    %81 = vector.load %arg7[%c0_50, %c3_51, %c0_52, %c0_53] : memref<1x4x8x8xbf16, #tpu.memory_space<vmem>>, vector<1x1x8x8xbf16>
    %82 = vector.shape_cast %81 : vector<1x1x8x8xbf16> to vector<8x8xbf16>
    %83 = vector.shape_cast %80 : vector<8x8xbf16> to vector<1x1x8x8xbf16>
    tpu.vector_store %arg7[%c0_50, %c3_51, %c0_52, %c0_53], %83 {strides = array<i32>} : memref<1x4x8x8xbf16, #tpu.memory_space<vmem>>, vector<1x1x8x8xbf16>,
    %84 = vector.extract_strided_slice %39 {offsets = [0, 24], sizes = [8, 8], strides = [1, 1]} : vector<8x32xbf16> to vector<8x8xbf16>
    %c0_54 = arith.constant 0 : index
    %c3_55 = arith.constant 3 : index
    %c0_56 = arith.constant 0 : index
    %c0_57 = arith.constant 0 : index
    %85 = vector.load %arg8[%c0_54, %c3_55, %c0_56, %c0_57] : memref<1x4x8x8xbf16, #tpu.memory_space<vmem>>, vector<1x1x8x8xbf16>
    %86 = vector.shape_cast %85 : vector<1x1x8x8xbf16> to vector<8x8xbf16>
    %87 = vector.shape_cast %84 : vector<8x8xbf16> to vector<1x1x8x8xbf16>
    tpu.vector_store %arg8[%c0_54, %c3_55, %c0_56, %c0_57], %87 {strides = array<i32>} : memref<1x4x8x8xbf16, #tpu.memory_space<vmem>>, vector<1x1x8x8xbf16>,
    return
  }
  func.func @transform_0(%arg0: i32, %arg1: i32) -> (i32, i32, i32) {
    %c0_i32 = arith.constant 0 : i32
    %c0_i32_0 = arith.constant 0 : i32
    return %arg0, %arg1, %c0_i32 : i32, i32, i32
  }
  func.func @transform_1(%arg0: i32, %arg1: i32) -> (i32, i32) {
    %c0_i32 = arith.constant 0 : i32
    %c0_i32_0 = arith.constant 0 : i32
    %c0_i32_1 = arith.constant 0 : i32
    return %c0_i32, %c0_i32_0 : i32, i32
  }
  func.func @transform_2(%arg0: i32, %arg1: i32) -> (i32, i32) {
    %c0_i32 = arith.constant 0 : i32
    %c0_i32_0 = arith.constant 0 : i32
    %c0_i32_1 = arith.constant 0 : i32
    return %c0_i32, %c0_i32_0 : i32, i32
  }
  func.func @transform_3(%arg0: i32, %arg1: i32) -> (i32, i32) {
    %c0_i32 = arith.constant 0 : i32
    %c0_i32_0 = arith.constant 0 : i32
    %c0_i32_1 = arith.constant 0 : i32
    return %c0_i32, %c0_i32_0 : i32, i32
  }
  func.func @transform_4(%arg0: i32, %arg1: i32) -> (i32, i32, i32, i32) {
    %c0_i32 = arith.constant 0 : i32
    %c0_i32_0 = arith.constant 0 : i32
    %c0_i32_1 = arith.constant 0 : i32
    return %arg0, %c0_i32, %arg1, %c0_i32_0 : i32, i32, i32, i32
  }
  func.func @transform_5(%arg0: i32, %arg1: i32) -> (i32, i32, i32, i32) {
    %c0_i32 = arith.constant 0 : i32
    %c0_i32_0 = arith.constant 0 : i32
    %c0_i32_1 = arith.constant 0 : i32
    return %arg0, %c0_i32, %c0_i32_0, %arg1 : i32, i32, i32, i32
  }
  func.func @transform_6(%arg0: i32, %arg1: i32) -> (i32, i32, i32, i32) {
    %c0_i32 = arith.constant 0 : i32
    %c0_i32_0 = arith.constant 0 : i32
    %c0_i32_1 = arith.constant 0 : i32
    return %arg0, %c0_i32, %arg1, %c0_i32_0 : i32, i32, i32, i32
  }
}

</mosaic_0001>

<llo_original>
// kernel: tpu_custom_call.1
$region0: #{tpu_custom_call.1}
  #allocation0 [shape = 'u32[]', space=smem, size = 0x4, offset = 0x4, fixed_abs, tag = 'smem constant byte address 0x4 - core index']
  #allocation1 [shape = 'u32[144,128]{1,0:T(1,128)}', space=vmem, size = 0x12000, scoped, tag = 'internal scratch']
  %s0 = inlined_call_operand.hbm [shape: f32[2,8,32], index: 0, kind: input, shape index: {}]
  %s1 = inlined_call_operand.vmem [shape: f32[1,32], index: 1, kind: input, shape index: {}]
  %s2 = inlined_call_operand.vmem [shape: f32[1,32], index: 2, kind: input, shape index: {}]
  %s3 = inlined_call_operand.hbm [shape: bf16[32,96], index: 3, kind: input, shape index: {}]
  %s4 = inlined_call_operand.hbm [shape: bf16[2,4,8,8], index: 4, kind: output, shape index: {0}]
  %s5 = inlined_call_operand.hbm [shape: bf16[2,4,8,8], index: 5, kind: output, shape index: {1}]
  %s6 = inlined_call_operand.hbm [shape: bf16[2,4,8,8], index: 6, kind: output, shape index: {2}]
  %7 = xla_tuple %s4, %s5, %s6
  %s8 = sld [smem:[#allocation0]]
  $region73: #{tpu_custom_call.1} parent=0
    _
  %s10 = ssub.s32 1, %s8
  %s11 = scalar_select 0, %s10, %s8
  $region1: #{tpu_custom_call.1} parent=0
    #allocation2 [shape = 'u8[8192]{0}', space=vmem, size = 0x2000, scoped, tag = 'input window, operand 0']
    #allocation3 [shape = 's32[2]{0}', space=sflag, size = 0x8, scoped, tag = 'scoped memory for tpu_custom_call.1']
    #allocation4 [shape = 's32[2]{0}', space=sflag, size = 0x8, scoped, tag = 'scoped memory for tpu_custom_call.1']
    #allocation5 [shape = 'u8[8192]{0}', space=vmem, size = 0x2000, scoped, tag = 'input window, operand 3, single buffered']
    #allocation6 [shape = 's32[1]{0}', space=sflag, size = 0x4, scoped, tag = 'scoped memory for tpu_custom_call.1']
    #allocation7 [shape = 'u8[16384]{0}', space=vmem, size = 0x4000, scoped, tag = 'output window, operand 0']
    #allocation8 [shape = 'u8[16384]{0}', space=vmem, size = 0x4000, scoped, tag = 'output window, operand 1']
    #allocation9 [shape = 's32[2]{0}', space=sflag, size = 0x8, scoped, tag = 'scoped memory for tpu_custom_call.1']
    #allocation10 [shape = 'u8[16384]{0}', space=vmem, size = 0x4000, scoped, tag = 'output window, operand 2']
    %12 = vsyncpa [#allocation3], 0
    %s13 = scalar_lea.sflag [#allocation3], 1
    %14 = vsyncpa %s13, 0
    %15 = vsyncpa [#allocation6], 0
    %16 = vsyncpa [#allocation4], 0
    %s17 = scalar_lea.sflag [#allocation4], 1
    %18 = vsyncpa %s17, 0
    %19 = vsyncpa [#allocation9], 0
    %s20 = scalar_lea.sflag [#allocation9], 1
    %21 = vsyncpa %s20, 0
    loop: start=0, step=1, limit=4
    $region2: #{tpu_custom_call.1} parent=1 // loop_pre_header
      _
    $region3: #{tpu_custom_call.1} parent=1 // loop_header
      %s23 = sphi 0, %s27
      %p24 = scmp.ge.s32.totalorder %s23, 4
      %s30 = sphi 0, %s42
      %s31 = sphi 0, %s38
      %s32 = sphi 0, %s30
      %s33 = sphi 0, %s31
      %s34 = sphi 0, %s32
      %s35 = sphi 0, %s33
      %s47 = sphi 0, %s49
      %s50 = sphi 0, %s47
      %s51 = sphi 0, %s50
      %s67 = sphi 0, %s51
      %s71 = sphi 0, %s71
      %s73 = sphi 0, %s71
      %s74 = sphi 0, %s73
      %s88 = sphi 0, %s74
      %s92 = sphi 0, %s92
      %s94 = sphi 0, %s92
      %s95 = sphi 0, %s94
      %s109 = sphi 0, %s95
      %s113 = sphi 0, %s113
      %s115 = sphi 0, %s113
      %s116 = sphi 0, %s115
      %s130 = sphi 0, %s116
      %s138 = sphi 0, %s140
      %s141 = sphi 0, %s138
      %s142 = sphi 0, %s141
      %s158 = sphi 0, %s142
      %s166 = sphi 0, %s168
      %s169 = sphi 0, %s166
      %s170 = sphi 0, %s169
      %s186 = sphi 0, %s170
      %s194 = sphi 0, %s196
      %s197 = sphi 0, %s194
      %s198 = sphi 0, %s197
      %s214 = sphi 0, %s198
    $region4: #{tpu_custom_call.1} parent=1 // loop_header_branch
      %26 = sbr.rel (%p24) target = $region8
    $region5: #{tpu_custom_call.1} parent=1 // loop_body
      %s28 = ssub.s32 %s23, 1
      %s29 = ssub.s32 %s23, 2
      %s36 = sadd.s32 1, %s31
      %p37 = scmp.ge.s32.totalorder %s36, 1
      %s38 = scalar_select %p37, 0, %s36
      %s39 = sadd.s32 1, %s30
      %s40 = scalar_select %p37, %s39, %s30
      %p41 = scmp.ge.s32.totalorder %s40, 2
      %s42 = scalar_select %p41, 0, %s40
      %s43 = ssub.s32 %s30, %s42
      %s44 = ssub.s32 %s31, %s38
      %s45 = sor.u32 %s43, %s44
      %p46 = scmp.eq.s32.totalorder %s45, 0
      %s48 = sadd.s32 %s47, 1
      %s49 = scalar_select %p46, %s47, %s48
      %p52 = pneg %p46
      %p53 = scmp.eq.s32.totalorder %s23, 1
      %p54 = por %p52, %p53
      %p55 = scmp.ne.s32.totalorder %s47, %s50
      %p56 = scmp.eq.s32.totalorder %s23, 0
      %p57 = por %p55, %p56
      %p58 = scmp.ne.s32.totalorder %s47, %s50
      %p59 = scmp.eq.s32.totalorder %s28, 1
      %p60 = por %p58, %p59
      %p61 = scmp.ne.s32.totalorder %s50, %s51
      %p62 = scmp.eq.s32.totalorder %s28, 0
      %p63 = por %p61, %p62
      %p64 = scmp.ne.s32.totalorder %s50, %s51
      %p65 = scmp.eq.s32.totalorder %s29, 1
      %p66 = por %p64, %p65
      %p68 = scmp.ne.s32.totalorder %s51, %s67
      %p69 = scmp.eq.s32.totalorder %s29, 0
      %p70 = por %p68, %p69
      %s72 = sadd.s32 %s71, 1
      %p75 = scmp.eq.s32.totalorder %s23, 1
      %p76 = scmp.ne.s32.totalorder %s71, %s73
      %p77 = scmp.eq.s32.totalorder %s23, 0
      %p78 = por %p76, %p77
      %p79 = scmp.ne.s32.totalorder %s71, %s73
      %p80 = scmp.eq.s32.totalorder %s28, 1
      %p81 = por %p79, %p80
      %p82 = scmp.ne.s32.totalorder %s73, %s74
      %p83 = scmp.eq.s32.totalorder %s28, 0
      %p84 = por %p82, %p83
      %p85 = scmp.ne.s32.totalorder %s73, %s74
      %p86 = scmp.eq.s32.totalorder %s29, 1
      %p87 = por %p85, %p86
      %p89 = scmp.ne.s32.totalorder %s74, %s88
      %p90 = scmp.eq.s32.totalorder %s29, 0
      %p91 = por %p89, %p90
      %s93 = sadd.s32 %s92, 1
      %p96 = scmp.eq.s32.totalorder %s23, 1
      %p97 = scmp.ne.s32.totalorder %s92, %s94
      %p98 = scmp.eq.s32.totalorder %s23, 0
      %p99 = por %p97, %p98
      %p100 = scmp.ne.s32.totalorder %s92, %s94
      %p101 = scmp.eq.s32.totalorder %s28, 1
      %p102 = por %p100, %p101
      %p103 = scmp.ne.s32.totalorder %s94, %s95
      %p104 = scmp.eq.s32.totalorder %s28, 0
      %p105 = por %p103, %p104
      %p106 = scmp.ne.s32.totalorder %s94, %s95
      %p107 = scmp.eq.s32.totalorder %s29, 1
      %p108 = por %p106, %p107
      %p110 = scmp.ne.s32.totalorder %s95, %s109
      %p111 = scmp.eq.s32.totalorder %s29, 0
      %p112 = por %p110, %p111
      %s114 = sadd.s32 %s113, 1
      %p117 = scmp.eq.s32.totalorder %s23, 1
      %p118 = scmp.ne.s32.totalorder %s113, %s115
      %p119 = scmp.eq.s32.totalorder %s23, 0
      %p120 = por %p118, %p119
      %p121 = scmp.ne.s32.totalorder %s113, %s115
      %p122 = scmp.eq.s32.totalorder %s28, 1
      %p123 = por %p121, %p122
      %p124 = scmp.ne.s32.totalorder %s115, %s116
      %p125 = scmp.eq.s32.totalorder %s28, 0
      %p126 = por %p124, %p125
      %p127 = scmp.ne.s32.totalorder %s115, %s116
      %p128 = scmp.eq.s32.totalorder %s29, 1
      %p129 = por %p127, %p128
      %p131 = scmp.ne.s32.totalorder %s116, %s130
      %p132 = scmp.eq.s32.totalorder %s29, 0
      %p133 = por %p131, %p132
      %s134 = ssub.s32 %s30, %s42
      %s135 = ssub.s32 %s31, %s38
      %s136 = sor.u32 %s134, %s135
      %p137 = scmp.eq.s32.totalorder %s136, 0
      %s139 = sadd.s32 %s138, 1
      %s140 = scalar_select %p137, %s138, %s139
      %p143 = pneg %p137
      %p144 = scmp.eq.s32.totalorder %s23, 1
      %p145 = por %p143, %p144
      %p146 = scmp.ne.s32.totalorder %s138, %s141
      %p147 = scmp.eq.s32.totalorder %s23, 0
      %p148 = por %p146, %p147
      %p149 = scmp.ne.s32.totalorder %s138, %s141
      %p150 = scmp.eq.s32.totalorder %s28, 1
      %p151 = por %p149, %p150
      %p152 = scmp.ne.s32.totalorder %s141, %s142
      %p153 = scmp.eq.s32.totalorder %s28, 0
      %p154 = por %p152, %p153
      %p155 = scmp.ne.s32.totalorder %s141, %s142
      %p156 = scmp.eq.s32.totalorder %s29, 1
      %p157 = por %p155, %p156
      %p159 = scmp.ne.s32.totalorder %s142, %s158
      %p160 = scmp.eq.s32.totalorder %s29, 0
      %p161 = por %p159, %p160
      %s162 = ssub.s32 %s30, %s42
      %s163 = ssub.s32 %s31, %s38
      %s164 = sor.u32 %s162, %s163
      %p165 = scmp.eq.s32.totalorder %s164, 0
      %s167 = sadd.s32 %s166, 1
      %s168 = scalar_select %p165, %s166, %s167
      %p171 = pneg %p165
      %p172 = scmp.eq.s32.totalorder %s23, 1
      %p173 = por %p171, %p172
      %p174 = scmp.ne.s32.totalorder %s166, %s169
      %p175 = scmp.eq.s32.totalorder %s23, 0
      %p176 = por %p174, %p175
      %p177 = scmp.ne.s32.totalorder %s166, %s169
      %p178 = scmp.eq.s32.totalorder %s28, 1
      %p179 = por %p177, %p178
      %p180 = scmp.ne.s32.totalorder %s169, %s170
      %p181 = scmp.eq.s32.totalorder %s28, 0
      %p182 = por %p180, %p181
      %p183 = scmp.ne.s32.totalorder %s169, %s170
      %p184 = scmp.eq.s32.totalorder %s29, 1
      %p185 = por %p183, %p184
      %p187 = scmp.ne.s32.totalorder %s170, %s186
      %p188 = scmp.eq.s32.totalorder %s29, 0
      %p189 = por %p187, %p188
      %s190 = ssub.s32 %s30, %s42
      %s191 = ssub.s32 %s31, %s38
      %s192 = sor.u32 %s190, %s191
      %p193 = scmp.eq.s32.totalorder %s192, 0
      %s195 = sadd.s32 %s194, 1
      %s196 = scalar_select %p193, %s194, %s195
      %p199 = pneg %p193
      %p200 = scmp.eq.s32.totalorder %s23, 1
      %p201 = por %p199, %p200
      %p202 = scmp.ne.s32.totalorder %s194, %s197
      %p203 = scmp.eq.s32.totalorder %s23, 0
      %p204 = por %p202, %p203
      %p205 = scmp.ne.s32.totalorder %s194, %s197
      %p206 = scmp.eq.s32.totalorder %s28, 1
      %p207 = por %p205, %p206
      %p208 = scmp.ne.s32.totalorder %s197, %s198
      %p209 = scmp.eq.s32.totalorder %s28, 0
      %p210 = por %p208, %p209
      %p211 = scmp.ne.s32.totalorder %s197, %s198
      %p212 = scmp.eq.s32.totalorder %s29, 1
      %p213 = por %p211, %p212
      %p215 = scmp.ne.s32.totalorder %s198, %s214
      %p216 = scmp.eq.s32.totalorder %s29, 0
      %p217 = por %p215, %p216
      %p218 = scmp.le.s32.totalorder 1, %s23
      %p219 = scmp.lt.s32.totalorder %s23, 3
      %p220 = pnand %p218, %p219
      %p221 = pneg %p220
      // Predicated region
      $region9: #{tpu_custom_call.1} parent=5 // pred_check
        _
      $region10: #{tpu_custom_call.1} parent=5 // pred_check_branch
        %223 = sbr.rel (%p220) target = $region12
      $region11: #{tpu_custom_call.1} parent=5 // pred_region
        %s224 = ssub.s32 %s23, 1
        // Predicated region
        $region13: #{tpu_custom_call.1} parent=11 // pred_check
          %p225 = pneg %p84
        $region14: #{tpu_custom_call.1} parent=11 // pred_check_branch
          %227 = sbr.rel (%p225) target = $region16
        $region15: #{tpu_custom_call.1} parent=11 // pred_region
          _
        $region16: #{tpu_custom_call.1} parent=11 // pred_fallthru
          _
        // Predicated region
        $region17: #{tpu_custom_call.1} parent=11 // pred_check
          %p228 = pneg %p105
        $region18: #{tpu_custom_call.1} parent=11 // pred_check_branch
          %230 = sbr.rel (%p228) target = $region20
        $region19: #{tpu_custom_call.1} parent=11 // pred_region
          _
        $region20: #{tpu_custom_call.1} parent=11 // pred_fallthru
          _
        // Predicated region
        $region21: #{tpu_custom_call.1} parent=11 // pred_check
          %p231 = pneg %p126
        $region22: #{tpu_custom_call.1} parent=11 // pred_check_branch
          %233 = sbr.rel (%p231) target = $region24
        $region23: #{tpu_custom_call.1} parent=11 // pred_region
          %s235 = ssub.s32 256, 256
          %236 = vsyncadd [#allocation6], %s235
          %s237 = sshll.u32 [#allocation5], 4
          %s238 = int_to_ptr.vmem [resolvable:$true] %s237
          %243 = dma.hbm_to_vmem [thread:$0]  %s3, 256, %s238, [#allocation6], 64, 64, 4
        $region24: #{tpu_custom_call.1} parent=11 // pred_fallthru
          _
      $region12: #{tpu_custom_call.1} parent=5 // pred_fallthru
        _
      %p244 = scmp.lt.s32.totalorder %s23, 2
      // Predicated region
      $region25: #{tpu_custom_call.1} parent=5 // pred_check
        %p245 = pneg %p244
      $region26: #{tpu_custom_call.1} parent=5 // pred_check_branch
        %247 = sbr.rel (%p245) target = $region28
      $region27: #{tpu_custom_call.1} parent=5 // pred_region
        // Predicated region
        $region29: #{tpu_custom_call.1} parent=27 // pred_check
          %p248 = pneg %p57
        $region30: #{tpu_custom_call.1} parent=27 // pred_check_branch
          %250 = sbr.rel (%p248) target = $region32
        $region31: #{tpu_custom_call.1} parent=27 // pred_region
          %s251 = sand.u32 %s47, 1
          %s252 = scalar_lea.sflag [#allocation3], %s251
          %s253 = sand.u32 %s47, 1
          %s254 = smul.addr %s253, 8
          %s255 = scalar_lea.vmem [#allocation2], %s254
          %s257 = ssub.s32 128, 128
          %258 = vsyncadd %s252, %s257
          %s259 = sadd.s32 %s31, %s30
          %s260 = smul.addr %s259, 128
          %s261 = scalar_lea.hbm %s0, %s260
          %s263 = sshll.u32 %s255, 4
          %s264 = int_to_ptr.vmem [resolvable:$true] %s263
          %266 = dma.hbm_to_vmem [thread:$0]  %s261, 128, %s264, %s252
        $region32: #{tpu_custom_call.1} parent=27 // pred_fallthru
          _
      $region28: #{tpu_custom_call.1} parent=5 // pred_fallthru
        _
      %p267 = scmp.le.s32.totalorder 1, %s23
      %p268 = scmp.lt.s32.totalorder %s23, 3
      %p269 = pnand %p267, %p268
      %p270 = pneg %p269
      // Predicated region
      $region33: #{tpu_custom_call.1} parent=5 // pred_check
        _
      $region34: #{tpu_custom_call.1} parent=5 // pred_check_branch
        %272 = sbr.rel (%p269) target = $region36
      $region35: #{tpu_custom_call.1} parent=5 // pred_region
        %s273 = ssub.s32 %s23, 1
        %s274 = sand.u32 %s50, 1
        %s275 = scalar_lea.sflag [#allocation3], %s274
        %s276 = sand.u32 %s50, 1
        %s277 = smul.addr %s276, 8
        %s278 = scalar_lea.vmem [#allocation2], %s277
        // Predicated region
        $region37: #{tpu_custom_call.1} parent=35 // pred_check
          %p279 = pneg %p63
        $region38: #{tpu_custom_call.1} parent=35 // pred_check_branch
          %281 = sbr.rel (%p279) target = $region40
        $region39: #{tpu_custom_call.1} parent=35 // pred_region
          %282 = dma.done %s275, 128
        $region40: #{tpu_custom_call.1} parent=35 // pred_fallthru
          _
        // Predicated region
        $region41: #{tpu_custom_call.1} parent=35 // pred_check
          %p283 = pneg %p126
        $region42: #{tpu_custom_call.1} parent=35 // pred_check_branch
          %285 = sbr.rel (%p283) target = $region44
        $region43: #{tpu_custom_call.1} parent=35 // pred_region
          %286 = dma.done [#allocation6], 256
        $region44: #{tpu_custom_call.1} parent=35 // pred_fallthru
          _
        %s287 = sand.u32 %s50, 1
        %s288 = scalar_lea.sflag [#allocation3], %s287
        %s289 = sand.u32 %s50, 1
        %s290 = smul.addr %s289, 8
        %s291 = scalar_lea.vmem [#allocation2], %s290
        %p292 = pneg %p63
        %p293 = pneg %p60
        %p294 = pneg %p84
        %p295 = pneg %p81
        %p296 = pneg %p105
        %p297 = pneg %p102
        %p298 = pneg %p126
        %p299 = pneg %p123
        %p300 = pneg %p154
        %p301 = pneg %p151
        %s302 = sand.u32 %s141, 1
        %s303 = scalar_lea.sflag [#allocation4], %s302
        %s304 = sand.u32 %s141, 1
        %s305 = smul.addr %s304, 16
        %s306 = scalar_lea.vmem [#allocation7], %s305
        %p307 = pneg %p182
        %p308 = pneg %p179
        %s309 = sand.u32 %s28, 1
        %s310 = scalar_lea.sflag [#allocation9], %s309
        %s311 = sand.u32 %s169, 1
        %s312 = smul.addr %s311, 16
        %s313 = scalar_lea.vmem [#allocation8], %s312
        %p314 = pneg %p210
        %p315 = pneg %p207
        %s316 = sand.u32 %s28, 1
        %s317 = scalar_lea.sflag [#allocation9], %s316
        %s318 = sand.u32 %s197, 1
        %s319 = smul.addr %s318, 16
        %s320 = scalar_lea.vmem [#allocation10], %s319
        %v322 = vld [vmem:[%s278] sm:$0xff]
        %v323 = vld [vmem:[%s1] sm:$0x1]
        %v324 = vld [vmem:[%s2] sm:$0x1]
        %vm325 = vcmask 261120
        %v326 = vsel %vm325, %v322, 0.0
        %327 = vadd.xlane.f32.xlu0 %v326
        %v328 = vpop.xlane.xlu0 %327
        %v329 = vrcp.pop 32.0
        %v330 = vmul.f32 %v328, %v329
        %v331 = vsub.f32 %v322, %v330
        %v332 = vmul.f32 %v331, %v331
        %v333 = vsel %vm325, %v332, 0.0
        %334 = vadd.xlane.f32.xlu0 %v333
        %v335 = vpop.xlane.xlu0 %334
        %v336 = vmul.f32 %v335, %v329
        %v337 = vadd.f32 %v336, 1e-05
        %v338 = vrsqrt.pop %v337
        %v339 = vmul.f32 %v331, %v338
        %v341 = vlaneseq
        %v342 = vshrl.u32 %v341, 7
        %v343 = vsub.s32 0, %v342
        %v344 = vrot.slane %v323, %v343
        %v346 = vmul.f32 %v339, %v344
        %v348 = vlaneseq
        %v349 = vshrl.u32 %v348, 7
        %v350 = vsub.s32 0, %v349
        %v351 = vrot.slane %v324, %v350
        %v353 = vadd.f32 %v346, %v351
        %v354 = vpack.c.bf16 %v353, %v353
        %v355 = vld [vmem:[#allocation5] sm:$0xf]
        %v356 = vld [vmem:[#allocation5 + $0x4] sm:$0xf]
        %v357 = vld [vmem:[#allocation5 + $0x8] sm:$0xf]
        %v358 = vld [vmem:[#allocation5 + $0xc] sm:$0xf]
        %v363 = vunpack.c.l.b16 %v355
        %v364 = vunpack.c.l.b16 %v356
        %v365 = vunpack.c.l.b16 %v357
        %v366 = vunpack.c.l.b16 %v358
        %v367 = vpack.c.b16 %v364, %v363
        %v368 = vpack.c.b16 %v366, %v365
        %v372 = vsel %vm325, %v354, 0
        %374 = vmatprep.subr.bf16.mxu0 0
        %375 = vmatpush1.bf16.msra.mxu0 %v367
        %376 = vmatprep.subr.bf16.mxu0 0
        %377 = vmatpush1.bf16.msra.mxu0 %v368
        %378 = vmatprep.subr.bf16.mxu0 0
        %379 = vmatpush1.bf16.msra.mxu0 0
        %380 = vmatprep.subr.bf16.mxu0 0
        %381 = vmatpush1.bf16.msra.mxu0 0
        %382 = vmatprep.subr.bf16.mxu0 0
        %383 = vmatpush1.bf16.msra.mxu0 0
        %384 = vmatprep.subr.bf16.mxu0 0
        %385 = vmatpush1.bf16.msra.mxu0 0
        %386 = vmatprep.subr.bf16.mxu0 0
        %387 = vmatpush1.bf16.msra.mxu0 0
        %388 = vmatprep.subr.bf16.mxu0 0
        %389 = vmatpush1.bf16.msra.mxu0 0
        %390 = vmatprep.subr.bf16.mxu0 0
        %391 = vmatpush1.bf16.msra.mxu0 0
        %392 = vmatprep.subr.bf16.mxu0 0
        %393 = vmatpush1.bf16.msra.mxu0 0
        %394 = vmatprep.subr.bf16.mxu0 0
        %395 = vmatpush1.bf16.msra.mxu0 0
        %396 = vmatprep.subr.bf16.mxu0 0
        %397 = vmatpush1.bf16.msra.mxu0 0
        %398 = vmatprep.subr.bf16.mxu0 0
        %399 = vmatpush1.bf16.msra.mxu0 0
        %400 = vmatprep.subr.bf16.mxu0 0
        %401 = vmatpush1.bf16.msra.mxu0 0
        %402 = vmatprep.subr.bf16.mxu0 0
        %403 = vmatpush1.bf16.msra.mxu0 0
        %404 = vmatprep.subr.bf16.mxu0 0
        %405 = vmatpush1.bf16.msra.mxu0 0
        %406 = vmatprep.mubr.bf16.mxu0 0
        %407 = vmatmul.mubr.bf16.gmra.mrb[0].mxu0 %v372
        %v408 = vpop.f32.mrb[0].mxu0
        %v409 = vadd.f32 0.0, %v408
        %v410 = vpop.f32.mrb[0].mxu0
        %v411 = vpop.f32.mrb[0].mxu0
        %v412 = vpop.f32.mrb[0].mxu0
        %413 = vdwg.mxu0
        %v414 = vpack.c.bf16 %v409, %v409
        %416 = vrot.lane.b32.xlu0 %v409, 96
        %v417 = vpop.permute.xlu0 %416
        %419 = vxpose.xlu0.b32.start [1/16] %v417, 128
        %420 = vxpose.xlu0.b32.cont [2/16] 0.0, 128
        %421 = vxpose.xlu0.b32.cont [3/16] 0.0, 128
        %422 = vxpose.xlu0.b32.cont [4/16] 0.0, 128
        %423 = vxpose.xlu0.b32.cont [5/16] 0.0, 128
        %424 = vxpose.xlu0.b32.cont [6/16] 0.0, 128
        %425 = vxpose.xlu0.b32.cont [7/16] 0.0, 128
        %426 = vxpose.xlu0.b32.cont [8/16] 0.0, 128
        %427 = vxpose.xlu0.b32.cont [9/16] 0.0, 128
        %428 = vxpose.xlu0.b32.cont [10/16] 0.0, 128
        %429 = vxpose.xlu0.b32.cont [11/16] 0.0, 128
        %430 = vxpose.xlu0.b32.cont [12/16] 0.0, 128
        %431 = vxpose.xlu0.b32.cont [13/16] 0.0, 128
        %432 = vxpose.xlu0.b32.cont [14/16] 0.0, 128
        %433 = vxpose.xlu0.b32.cont [15/16] 0.0, 128
        %434 = vxpose.xlu0.b32.end [16/16] 0.0, 128
        %v435 = vpop.trf.xlu0
        %v436 = vpop.trf.xlu0
        %v437 = vpop.trf.xlu0
        %v438 = vpop.trf.xlu0
        %v439 = vpop.trf.xlu0
        %v440 = vpop.trf.xlu0
        %v441 = vpop.trf.xlu0
        %v442 = vpop.trf.xlu0
        %v443 = vpop.trf.xlu0
        %v444 = vpop.trf.xlu0
        %v445 = vpop.trf.xlu0
        %v446 = vpop.trf.xlu0
        %v447 = vpop.trf.xlu0
        %v448 = vpop.trf.xlu0
        %v449 = vpop.trf.xlu0
        %v450 = vpop.trf.xlu0
        %v451 = vpack.c.bf16 %v436, %v435
        %v452 = vpack.c.bf16 %v438, %v437
        %vm453 = vcmask 60416
        %454 = vst.msk [vmem:[%s306] sm:$0xf] %vm453, %v414
        %455 = vst.msk [vmem:[%s313] sm:$0xf] %vm453, %v451
        %v457 = vunpack.c.l.b16 %v414
        %v458 = vpack.c.b16 %v457, %v457
        %459 = vrot.lane.b32.xlu0 %v458, 64
        %v460 = vpop.permute.xlu0 %459
        %462 = vst.msk [vmem:[%s320] sm:$0xf] %vm453, %v460
        %463 = vrot.lane.b32.xlu0 %v458, 120
        %v464 = vpop.permute.xlu0 %463
        %s466 = scalar_lea.vmem %s306, 4 [#allocation7]
        %467 = vst.msk [vmem:[%s466] sm:$0xf] %vm453, %v464
        %v469 = vunpack.c.h.b16 %v451
        %v470 = vpack.c.b16 %v469, %v469
        %s472 = scalar_lea.vmem %s313, 4 [#allocation8]
        %473 = vst.msk [vmem:[%s472] sm:$0xf] %vm453, %v470
        %474 = vrot.lane.b32.xlu0 %v458, 56
        %v475 = vpop.permute.xlu0 %474
        %s477 = scalar_lea.vmem %s320, 4 [#allocation10]
        %478 = vst.msk [vmem:[%s477] sm:$0xf] %vm453, %v475
        %479 = vrot.lane.b32.xlu0 %v458, 112
        %v480 = vpop.permute.xlu0 %479
        %s482 = scalar_lea.vmem %s306, 8 [#allocation7]
        %483 = vst.msk [vmem:[%s482] sm:$0xf] %vm453, %v480
        %s484 = scalar_lea.vmem %s313, 8 [#allocation8]
        %485 = vst.msk [vmem:[%s484] sm:$0xf] %vm453, %v452
        %486 = vrot.lane.b32.xlu0 %v458, 48
        %v487 = vpop.permute.xlu0 %486
        %s489 = scalar_lea.vmem %s320, 8 [#allocation10]
        %490 = vst.msk [vmem:[%s489] sm:$0xf] %vm453, %v487
        %491 = vrot.lane.b32.xlu0 %v458, 104
        %v492 = vpop.permute.xlu0 %491
        %s494 = scalar_lea.vmem %s306, 12 [#allocation7]
        %495 = vst.msk [vmem:[%s494] sm:$0xf] %vm453, %v492
        %v497 = vunpack.c.h.b16 %v452
        %v498 = vpack.c.b16 %v497, %v497
        %s500 = scalar_lea.vmem %s313, 12 [#allocation8]
        %501 = vst.msk [vmem:[%s500] sm:$0xf] %vm453, %v498
        %502 = vrot.lane.b32.xlu0 %v458, 40
        %v503 = vpop.permute.xlu0 %502
        %s505 = scalar_lea.vmem %s320, 12 [#allocation10]
        %506 = vst.msk [vmem:[%s505] sm:$0xf] %vm453, %v503
        %s507 = sand.u32 %s141, 1
        %s508 = scalar_lea.sflag [#allocation4], %s507
        %s509 = sand.u32 %s141, 1
        %s510 = smul.addr %s509, 16
        %s511 = scalar_lea.vmem [#allocation7], %s510
        %s512 = sand.u32 %s28, 1
        %s513 = scalar_lea.sflag [#allocation9], %s512
        %s514 = sand.u32 %s169, 1
        %s515 = smul.addr %s514, 16
        %s516 = scalar_lea.vmem [#allocation8], %s515
        %s517 = sand.u32 %s28, 1
        %s518 = scalar_lea.sflag [#allocation9], %s517
        %s519 = sand.u32 %s197, 1
        %s520 = smul.addr %s519, 16
        %s521 = scalar_lea.vmem [#allocation10], %s520
        // Predicated region
        $region45: #{tpu_custom_call.1} parent=35 // pred_check
          %p522 = pneg %p151
        $region46: #{tpu_custom_call.1} parent=35 // pred_check_branch
          %524 = sbr.rel (%p522) target = $region48
        $region47: #{tpu_custom_call.1} parent=35 // pred_region
          %s526 = ssub.s32 256, 256
          %527 = vsyncadd %s508, %s526
          %s528 = smul.addr %s32, 4
          %s529 = sadd.s32 %s33, %s528
          %s530 = smul.addr %s529, 64
          %s531 = scalar_lea.hbm %s4, %s530
          %s532 = sshll.u32 %s511, 4
          %s533 = int_to_ptr.vmem [resolvable:$true] %s532
          %538 = dma.vmem_to_hbm [thread:$0]  %s533, 256, %s531, %s508, 64, 64, 4
        $region48: #{tpu_custom_call.1} parent=35 // pred_fallthru
          _
        // Predicated region
        $region49: #{tpu_custom_call.1} parent=35 // pred_check
          %p539 = pneg %p179
        $region50: #{tpu_custom_call.1} parent=35 // pred_check_branch
          %541 = sbr.rel (%p539) target = $region52
        $region51: #{tpu_custom_call.1} parent=35 // pred_region
          %s543 = ssub.s32 256, 256
          %544 = vsyncadd %s513, %s543
          %s545 = smul.addr %s32, 4
          %s546 = sadd.s32 %s33, %s545
          %s547 = smul.addr %s546, 64
          %s548 = scalar_lea.hbm %s5, %s547
          %s549 = sshll.u32 %s516, 4
          %s550 = int_to_ptr.vmem [resolvable:$true] %s549
          %555 = dma.vmem_to_hbm [thread:$0]  %s550, 256, %s548, %s513, 64, 64, 4
        $region52: #{tpu_custom_call.1} parent=35 // pred_fallthru
          _
        // Predicated region
        $region53: #{tpu_custom_call.1} parent=35 // pred_check
          %p556 = pneg %p207
        $region54: #{tpu_custom_call.1} parent=35 // pred_check_branch
          %558 = sbr.rel (%p556) target = $region56
        $region55: #{tpu_custom_call.1} parent=35 // pred_region
          %s560 = ssub.s32 256, 256
          %561 = vsyncadd %s518, %s560
          %s562 = smul.addr %s32, 4
          %s563 = sadd.s32 %s33, %s562
          %s564 = smul.addr %s563, 64
          %s565 = scalar_lea.hbm %s6, %s564
          %s566 = sshll.u32 %s521, 4
          %s567 = int_to_ptr.vmem [resolvable:$true] %s566
          %572 = dma.vmem_to_hbm [thread:$0]  %s567, 256, %s565, %s518, 64, 64, 4
        $region56: #{tpu_custom_call.1} parent=35 // pred_fallthru
          _
      $region36: #{tpu_custom_call.1} parent=5 // pred_fallthru
        _
      %p573 = scmp.le.s32.totalorder 2, %s23
      // Predicated region
      $region57: #{tpu_custom_call.1} parent=5 // pred_check
        %p574 = pneg %p573
      $region58: #{tpu_custom_call.1} parent=5 // pred_check_branch
        %576 = sbr.rel (%p574) target = $region60
      $region59: #{tpu_custom_call.1} parent=5 // pred_region
        %s577 = ssub.s32 %s23, 2
        // Predicated region
        $region61: #{tpu_custom_call.1} parent=59 // pred_check
          %p578 = pneg %p157
        $region62: #{tpu_custom_call.1} parent=59 // pred_check_branch
          %580 = sbr.rel (%p578) target = $region64
        $region63: #{tpu_custom_call.1} parent=59 // pred_region
          %s581 = sand.u32 %s142, 1
          %s582 = scalar_lea.sflag [#allocation4], %s581
          %s583 = sand.u32 %s142, 1
          %s584 = smul.addr %s583, 16
          %s585 = scalar_lea.vmem [#allocation7], %s584
          %586 = dma.done %s582, 256
        $region64: #{tpu_custom_call.1} parent=59 // pred_fallthru
          _
        // Predicated region
        $region65: #{tpu_custom_call.1} parent=59 // pred_check
          %p587 = pneg %p185
        $region66: #{tpu_custom_call.1} parent=59 // pred_check_branch
          %589 = sbr.rel (%p587) target = $region68
        $region67: #{tpu_custom_call.1} parent=59 // pred_region
          %s590 = sand.u32 %s29, 1
          %s591 = scalar_lea.sflag [#allocation9], %s590
          %s592 = sand.u32 %s170, 1
          %s593 = smul.addr %s592, 16
          %s594 = scalar_lea.vmem [#allocation8], %s593
          %595 = dma.done %s591, 256
        $region68: #{tpu_custom_call.1} parent=59 // pred_fallthru
          _
        // Predicated region
        $region69: #{tpu_custom_call.1} parent=59 // pred_check
          %p596 = pneg %p213
        $region70: #{tpu_custom_call.1} parent=59 // pred_check_branch
          %598 = sbr.rel (%p596) target = $region72
        $region71: #{tpu_custom_call.1} parent=59 // pred_region
          %s599 = sand.u32 %s29, 1
          %s600 = scalar_lea.sflag [#allocation9], %s599
          %s601 = sand.u32 %s198, 1
          %s602 = smul.addr %s601, 16
          %s603 = scalar_lea.vmem [#allocation10], %s602
          %604 = dma.done %s600, 256
        $region72: #{tpu_custom_call.1} parent=59 // pred_fallthru
          _
      $region60: #{tpu_custom_call.1} parent=5 // pred_fallthru
        _
    $region6: #{tpu_custom_call.1} parent=1 // loop_footer
      %s27 = sadd.s32 1, %s23
    $region7: #{tpu_custom_call.1} parent=1 // loop_footer_branch
      %22 = sbr.rel target = $region3
    $region8: #{tpu_custom_call.1} parent=1 // loop_exit
      _
    %605 = vsyncpa [#allocation3], 1
    %s606 = scalar_lea.sflag [#allocation3], 1
    %607 = vsyncpa %s606, 1
    %608 = vsyncpa [#allocation6], 1
    %609 = vsyncpa [#allocation4], 1
    %s610 = scalar_lea.sflag [#allocation4], 1
    %611 = vsyncpa %s610, 1
    %612 = vsyncpa [#allocation9], 1
    %s613 = scalar_lea.sflag [#allocation9], 1
    %614 = vsyncpa %s613, 1

</llo_original>
